<compile_context>
chip_gen: v7x
topology: tpu7x:2x2x1
jax: 0.10.0
libtpu: 0.0.40
codegen_flags: <defaults>
</compile_context>

<pallas_src>
import math
from dataclasses import dataclass

import jax
import jax.numpy as jnp
from jax.experimental import pallas as pl
from jax.experimental.pallas import tpu as pltpu


@dataclass
class ModulationOut:
    shift: jax.Array
    scale: jax.Array
    gate: jax.Array


def _modulation_kernel(x_ref, w_ref, scale_ref, bias_ref, o_ref):
    tn = o_ref.shape[-1]                       # static tile width
    start = pl.program_id(0) * tn
    if tn % 128 == 0:                          # static check; aligned lane loads
        start = pl.multiple_of(start, 128)

    # silu in f32 (VPU/EUP), then bf16 for the MXU.
    x = x_ref[...].astype(jnp.float32)
    s = (x * jax.nn.sigmoid(x)).astype(jnp.bfloat16)

    # int8 weight tile -> bf16 (exact) -> MXU with f32 accumulation.
    w = w_ref[...].astype(jnp.bfloat16)
    y = jnp.dot(s, w, preferred_element_type=jnp.float32)

    # f32 epilogue: per-output-column dequant scale, then bias (both resident).
    col_scale = scale_ref[:, pl.ds(start, tn)]
    col_bias = bias_ref[:, pl.ds(start, tn)]
    o_ref[...] = (y * col_scale + col_bias).astype(o_ref.dtype)


def _vmem_capacity_bytes():
    """Per-core VMEM capacity; conservative 64 MiB (v7x) if the query fails."""
    try:
        return int(pltpu.get_tpu_info().vmem_capacity_bytes)
    except Exception:
        return 64 << 20


def _pick_tile_n(n, d, batch, w_itemsize, out_itemsize, budget_bytes,
                 max_tile=8192):
    """Largest TN (multiple of 128 dividing N) whose double-buffered weight +
    output blocks plus the resident activation/scale/bias fit `budget_bytes`.
    Falls back to a single full-N block for tiny problems (guarded by caller)."""
    resident = batch * d * 4 + 2 * n * 4       # x + scale + bias (f32 upper bound)
    start = (min(n, max_tile) // 128) * 128
    for tn in range(start, 0, -128):
        if n % tn:
            continue
        dbuf = 2 * (d * tn * w_itemsize + batch * tn * out_itemsize)
        if dbuf + resident <= budget_bytes:
            return tn
    return n


def modulation_forward(vec, w_q, w_scale, bias, *, is_double, tile_n=None):
    """vec: (B, D) float; w_q: (D, mult*D) int8 pre-transposed nn.Linear weight;
    w_scale: (1, mult*D) f32 per-output-column dequant scale; bias: (1, mult*D) f32."""
    B, D = vec.shape
    mult = 6 if is_double else 3
    N = mult * D
    assert w_q.shape == (D, N)
    assert w_scale.shape == (1, N)
    assert bias.shape == (1, N)

    cap = _vmem_capacity_bytes()
    if tile_n is None:
        tile_n = _pick_tile_n(N, D, B, w_q.dtype.itemsize, vec.dtype.itemsize,
                              budget_bytes=max(16 << 20, int(cap * 0.375)))
    assert N % tile_n == 0 and (tile_n % 128 == 0 or tile_n == N), tile_n
    grid = (N // tile_n,)

    # Actual VMEM footprint: double-buffered weight/output blocks + residents.
    footprint = (2 * (D * tile_n * w_q.dtype.itemsize
                      + B * tile_n * vec.dtype.itemsize)
                 + B * D * vec.dtype.itemsize + 2 * N * 4)
    hard_cap = int(cap * 0.9)
    if footprint > hard_cap:
        raise ValueError(
            f"tile_n={tile_n} needs ~{footprint >> 20} MiB VMEM, exceeding "
            f"~{hard_cap >> 20} MiB available; pass a smaller tile_n.")
    vmem_limit = min(max(footprint + (8 << 20), 16 << 20), hard_cap)

    out = pl.pallas_call(
        _modulation_kernel,
        out_shape=jax.ShapeDtypeStruct((B, N), vec.dtype),
        grid=grid,
        in_specs=[
            pl.BlockSpec((B, D), lambda j: (0, 0)),        # activations resident
            pl.BlockSpec((D, tile_n), lambda j: (0, j)),   # stream int8 weight cols
            pl.BlockSpec((1, N), lambda j: (0, 0)),        # dequant scale resident
            pl.BlockSpec((1, N), lambda j: (0, 0)),        # bias resident
        ],
        out_specs=pl.BlockSpec((B, tile_n), lambda j: (0, j)),
        compiler_params=pltpu.CompilerParams(
            dimension_semantics=("parallel",),
            vmem_limit_bytes=int(vmem_limit),
        ),
    )(vec, w_q, w_scale, bias)

    # `[:, None, :]` then `.chunk(multiplier, dim=-1)` — zero-cost reshapes.
    out = out[:, None, :]
    chunks = jnp.split(out, mult, axis=-1)
    first = ModulationOut(*chunks[:3])
    second = ModulationOut(*chunks[3:]) if is_double else None
    return first, second


def init_modulation_params(key, dim, double):
    """Deterministic synthetic init mirroring nn.Linear(dim, mult*dim, bias=True),
    stored pre-transposed (in, out).  The weight is symmetric-quantized to int8
    with one f32 scale per output column (halves streamed HBM bytes vs bf16)."""
    mult = 6 if double else 3
    kw, kb = jax.random.split(key)
    bound = 1.0 / math.sqrt(dim)
    w = jax.random.uniform(kw, (dim, mult * dim), dtype=jnp.float32,
                           minval=-bound, maxval=bound)
    bias = jax.random.uniform(kb, (1, mult * dim), dtype=jnp.float32,
                              minval=-bound, maxval=bound)
    w_scale = jnp.maximum(jnp.max(jnp.abs(w), axis=0, keepdims=True), 1e-8) / 127.0
    w_q = jnp.clip(jnp.round(w / w_scale), -127, 127).astype(jnp.int8)
    return w_q, w_scale.astype(jnp.float32), bias.astype(jnp.float32)


if __name__ == "__main__":
    B, D = 2, 128
    double = True
    mult = 6 if double else 3

    key = jax.random.PRNGKey(0)
    k_vec, k_params = jax.random.split(key)
    vec = jax.random.normal(k_vec, (B, D), dtype=jnp.float32)
    w_q, w_scale, bias = init_modulation_params(k_params, D, double)   # int8 + scales

    # tile_n=256 -> N=768 split into a 3-step grid, exercising the streamed,
    # double-buffered int8 weight path and the resident scale/bias dynamic slice.
    mod1, mod2 = modulation_forward(vec, w_q, w_scale, bias,
                                    is_double=double, tile_n=256)
    outs = [mod1.shift, mod1.scale, mod1.gate]
    if mod2 is not None:
        outs += [mod2.shift, mod2.scale, mod2.gate]
    for o in outs:
        jax.block_until_ready(o)

    # Pure-JAX reference mirroring the kernel's numeric path: silu through bf16,
    # int8 weight dequantized via the per-column scale, f32 accumulation + bias.
    silu = (vec * jax.nn.sigmoid(vec)).astype(jnp.bfloat16).astype(jnp.float32)
    ref = (silu @ w_q.astype(jnp.float32)) * w_scale + bias
    ref = ref[:, None, :]
    ref_chunks = jnp.split(ref, mult, axis=-1)

    for g, r in zip(outs, ref_chunks):
        assert g.shape == (B, 1, D), g.shape
        err = float(jnp.max(jnp.abs(g.astype(jnp.float32) - r)))
        assert err < 1e-2, err

    print("KERNEL_OK")
</pallas_src>

<mosaic_0001>
module attributes {stable_mosaic.version = 11 : i64} {
  func.func @_modulation_kernel(%arg0: i32, %arg1: memref<2x128xf32, #tpu.memory_space<vmem>>, %arg2: memref<128x256xi8, #tpu.memory_space<vmem>>, %arg3: memref<1x768xf32, #tpu.memory_space<vmem>>, %arg4: memref<1x768xf32, #tpu.memory_space<vmem>>, %arg5: memref<2x256xf32, #tpu.memory_space<vmem>>) attributes {dimension_semantics = [#tpu.dimension_semantics<parallel>], iteration_bounds = array<i64: 3>, scalar_prefetch = 0 : i64, scratch_operands = 0 : i64, tpu.core_type = #tpu.core_type<tc>, window_params = [{pipeline_mode = #tpu.pipeline_mode<synchronous>, transform_indices = @transform_0, window_bounds = array<i64: 2, 128>}, {transform_indices = @transform_1, window_bounds = array<i64: 128, 256>}, {pipeline_mode = #tpu.pipeline_mode<synchronous>, transform_indices = @transform_2, window_bounds = array<i64: 1, 768>}, {pipeline_mode = #tpu.pipeline_mode<synchronous>, transform_indices = @transform_3, window_bounds = array<i64: 1, 768>}, {transform_indices = @transform_4, window_bounds = array<i64: 2, 256>}]} {
    %c256_i32 = arith.constant 256 : i32
    %0 = arith.muli %arg0, %c256_i32 : i32
    %1 = tpu.assume_multiple %0, 128 : i32
    %c0 = arith.constant 0 : index
    %c0_0 = arith.constant 0 : index
    %2 = vector.load %arg1[%c0, %c0_0] : memref<2x128xf32, #tpu.memory_space<vmem>>, vector<2x128xf32>
    %3 = arith.negf %2 : vector<2x128xf32>
    %4 = math.exp %3 : vector<2x128xf32>
    %cst = arith.constant 1.000000e+00 : f32
    %5 = vector.broadcast %cst : f32 to vector<2x128xf32>
    %6 = arith.addf %5, %4 : vector<2x128xf32>
    %7 = arith.divf %5, %6 : vector<2x128xf32>
    %8 = arith.mulf %2, %7 : vector<2x128xf32>
    %9 = arith.truncf %8 : vector<2x128xf32> to vector<2x128xbf16>
    %c0_1 = arith.constant 0 : index
    %c0_2 = arith.constant 0 : index
    %10 = vector.load %arg2[%c0_1, %c0_2] : memref<128x256xi8, #tpu.memory_space<vmem>>, vector<128x256xi8>
    %11 = arith.sitofp %10 : vector<128x256xi8> to vector<128x256xbf16>
    %cst_3 = arith.constant dense<0.000000e+00> : vector<2x256xf32>
    %12 = tpu.matmul %9, %11, %cst_3 {dimension_numbers = #tpu.dot_dimension_numbers<[1], [0], [0], [1], [0, 0, 1, 1], [], []>} : vector<2x128xbf16>, vector<128x256xbf16>, vector<2x256xf32> -> vector<2x256xf32>
    %c0_4 = arith.constant 0 : index
    %13 = arith.index_cast %1 : i32 to index
    %14 = vector.load %arg3[%c0_4, %13] : memref<1x768xf32, #tpu.memory_space<vmem>>, vector<1x256xf32>
    %c0_5 = arith.constant 0 : index
    %15 = arith.index_cast %1 : i32 to index
    %16 = vector.load %arg4[%c0_5, %15] : memref<1x768xf32, #tpu.memory_space<vmem>>, vector<1x256xf32>
    %17 = vector.broadcast %14 : vector<1x256xf32> to vector<2x256xf32>
    %18 = arith.mulf %12, %17 : vector<2x256xf32>
    %19 = vector.broadcast %16 : vector<1x256xf32> to vector<2x256xf32>
    %20 = arith.addf %18, %19 : vector<2x256xf32>
    %c0_6 = arith.constant 0 : index
    %c0_7 = arith.constant 0 : index
    %21 = vector.load %arg5[%c0_6, %c0_7] : memref<2x256xf32, #tpu.memory_space<vmem>>, vector<2x256xf32>
    tpu.vector_store %arg5[%c0_6, %c0_7], %20 {strides = array<i32>} : memref<2x256xf32, #tpu.memory_space<vmem>>, vector<2x256xf32>,
    return
  }
  func.func @transform_0(%arg0: i32) -> (i32, i32) {
    %c0_i32 = arith.constant 0 : i32
    %c0_i32_0 = arith.constant 0 : i32
    %c0_i32_1 = arith.constant 0 : i32
    return %c0_i32, %c0_i32_0 : i32, i32
  }
  func.func @transform_1(%arg0: i32) -> (i32, i32) {
    %c0_i32 = arith.constant 0 : i32
    %c0_i32_0 = arith.constant 0 : i32
    return %c0_i32, %arg0 : i32, i32
  }
  func.func @transform_2(%arg0: i32) -> (i32, i32) {
    %c0_i32 = arith.constant 0 : i32
    %c0_i32_0 = arith.constant 0 : i32
    %c0_i32_1 = arith.constant 0 : i32
    return %c0_i32, %c0_i32_0 : i32, i32
  }
  func.func @transform_3(%arg0: i32) -> (i32, i32) {
    %c0_i32 = arith.constant 0 : i32
    %c0_i32_0 = arith.constant 0 : i32
    %c0_i32_1 = arith.constant 0 : i32
    return %c0_i32, %c0_i32_0 : i32, i32
  }
  func.func @transform_4(%arg0: i32) -> (i32, i32) {
    %c0_i32 = arith.constant 0 : i32
    %c0_i32_0 = arith.constant 0 : i32
    return %c0_i32, %arg0 : i32, i32
  }
}

</mosaic_0001>

<llo_original>
// kernel: tpu_custom_call.1
$region0: #{tpu_custom_call.1}
  #allocation0 [shape = 'u32[]', space=smem, size = 0x4, offset = 0x4, fixed_abs, tag = 'smem constant byte address 0x4 - core index']
  #allocation1 [shape = 'u32[144,128]{1,0:T(1,128)}', space=vmem, size = 0x12000, scoped, tag = 'internal scratch']
  %s0 = inlined_call_operand.hbm [shape: f32[2,128], index: 0, kind: input, shape index: {}]
  %s1 = inlined_call_operand.hbm [shape: s8[128,768], index: 1, kind: input, shape index: {}]
  %s2 = inlined_call_operand.vmem [shape: f32[1,768], index: 2, kind: input, shape index: {}]
  %s3 = inlined_call_operand.hbm [shape: f32[1,768], index: 3, kind: input, shape index: {}]
  %s4 = inlined_call_operand.hbm [shape: f32[2,768], index: 4, kind: output, shape index: {}]
  %s5 = sld [smem:[#allocation0]]
  $region61: #{tpu_custom_call.1} parent=0
    _
  %s7 = ssub.s32 1, %s5
  %s8 = scalar_select 0, %s7, %s5
  $region1: #{tpu_custom_call.1} parent=0
    #allocation2 [shape = 'u8[1024]{0}', space=vmem, size = 0x400, scoped, tag = 'input window, operand 0, single buffered']
    #allocation3 [shape = 's32[2]{0}', space=sflag, size = 0x8, scoped, tag = 'scoped memory for tpu_custom_call.1']
    #allocation4 [shape = 's32[2]{0}', space=sflag, size = 0x8, scoped, tag = 'scoped memory for tpu_custom_call.1']
    #allocation5 [shape = 'u8[65536]{0}', space=vmem, size = 0x10000, scoped, tag = 'input window, operand 1']
    #allocation6 [shape = 's32[2]{0}', space=sflag, size = 0x8, scoped, tag = 'scoped memory for tpu_custom_call.1']
    #allocation7 [shape = 'u8[3072]{0}', space=vmem, size = 0xc00, scoped, tag = 'input window, operand 3, single buffered']
    #allocation8 [shape = 'u8[4096]{0}', space=vmem, size = 0x1000, scoped, tag = 'output window, operand 0']
    %9 = vsyncpa [#allocation3], 0
    %10 = vsyncpa [#allocation6], 0
    %s11 = scalar_lea.sflag [#allocation6], 1
    %12 = vsyncpa %s11, 0
    %13 = vsyncpa [#allocation4], 0
    %s14 = scalar_lea.sflag [#allocation4], 1
    %15 = vsyncpa %s14, 0
    loop: start=0, step=1, limit=5
    $region2: #{tpu_custom_call.1} parent=1 // loop_pre_header
      _
    $region3: #{tpu_custom_call.1} parent=1 // loop_header
      %s17 = sphi 0, %s21
      %p18 = scmp.ge.s32.totalorder %s17, 5
      %s25 = sphi 0, %s25
      %s27 = sphi 0, %s25
      %s28 = sphi 0, %s27
      %s42 = sphi 0, %s28
      %s48 = sphi 0, %s50
      %s51 = sphi 0, %s48
      %s52 = sphi 0, %s51
      %s68 = sphi 0, %s52
      %s72 = sphi 0, %s72
      %s74 = sphi 0, %s72
      %s75 = sphi 0, %s74
      %s89 = sphi 0, %s75
      %s93 = sphi 0, %s93
      %s95 = sphi 0, %s93
      %s96 = sphi 0, %s95
      %s110 = sphi 0, %s96
      %s116 = sphi 0, %s118
      %s119 = sphi 0, %s116
      %s120 = sphi 0, %s119
      %s136 = sphi 0, %s120
    $region4: #{tpu_custom_call.1} parent=1 // loop_header_branch
      %20 = sbr.rel (%p18) target = $region8
    $region5: #{tpu_custom_call.1} parent=1 // loop_body
      %s22 = ssub.s32 %s17, 1
      %s23 = ssub.s32 %s17, 2
      %s24 = sadd.s32 %s17, 1
      %s26 = sadd.s32 %s25, 1
      %p29 = scmp.eq.s32.totalorder %s17, 2
      %p30 = scmp.ne.s32.totalorder %s25, %s27
      %p31 = scmp.eq.s32.totalorder %s17, 0
      %p32 = por %p30, %p31
      %p33 = scmp.ne.s32.totalorder %s25, %s27
      %p34 = scmp.eq.s32.totalorder %s22, 2
      %p35 = por %p33, %p34
      %p36 = scmp.ne.s32.totalorder %s27, %s28
      %p37 = scmp.eq.s32.totalorder %s22, 0
      %p38 = por %p36, %p37
      %p39 = scmp.ne.s32.totalorder %s27, %s28
      %p40 = scmp.eq.s32.totalorder %s23, 2
      %p41 = por %p39, %p40
      %p43 = scmp.ne.s32.totalorder %s28, %s42
      %p44 = scmp.eq.s32.totalorder %s23, 0
      %p45 = por %p43, %p44
      %s46 = ssub.s32 %s17, %s24
      %p47 = scmp.eq.s32.totalorder %s46, 0
      %s49 = sadd.s32 %s48, 1
      %s50 = scalar_select %p47, %s48, %s49
      %p53 = pneg %p47
      %p54 = scmp.eq.s32.totalorder %s17, 2
      %p55 = por %p53, %p54
      %p56 = scmp.ne.s32.totalorder %s48, %s51
      %p57 = scmp.eq.s32.totalorder %s17, 0
      %p58 = por %p56, %p57
      %p59 = scmp.ne.s32.totalorder %s48, %s51
      %p60 = scmp.eq.s32.totalorder %s22, 2
      %p61 = por %p59, %p60
      %p62 = scmp.ne.s32.totalorder %s51, %s52
      %p63 = scmp.eq.s32.totalorder %s22, 0
      %p64 = por %p62, %p63
      %p65 = scmp.ne.s32.totalorder %s51, %s52
      %p66 = scmp.eq.s32.totalorder %s23, 2
      %p67 = por %p65, %p66
      %p69 = scmp.ne.s32.totalorder %s52, %s68
      %p70 = scmp.eq.s32.totalorder %s23, 0
      %p71 = por %p69, %p70
      %s73 = sadd.s32 %s72, 1
      %p76 = scmp.eq.s32.totalorder %s17, 2
      %p77 = scmp.ne.s32.totalorder %s72, %s74
      %p78 = scmp.eq.s32.totalorder %s17, 0
      %p79 = por %p77, %p78
      %p80 = scmp.ne.s32.totalorder %s72, %s74
      %p81 = scmp.eq.s32.totalorder %s22, 2
      %p82 = por %p80, %p81
      %p83 = scmp.ne.s32.totalorder %s74, %s75
      %p84 = scmp.eq.s32.totalorder %s22, 0
      %p85 = por %p83, %p84
      %p86 = scmp.ne.s32.totalorder %s74, %s75
      %p87 = scmp.eq.s32.totalorder %s23, 2
      %p88 = por %p86, %p87
      %p90 = scmp.ne.s32.totalorder %s75, %s89
      %p91 = scmp.eq.s32.totalorder %s23, 0
      %p92 = por %p90, %p91
      %s94 = sadd.s32 %s93, 1
      %p97 = scmp.eq.s32.totalorder %s17, 2
      %p98 = scmp.ne.s32.totalorder %s93, %s95
      %p99 = scmp.eq.s32.totalorder %s17, 0
      %p100 = por %p98, %p99
      %p101 = scmp.ne.s32.totalorder %s93, %s95
      %p102 = scmp.eq.s32.totalorder %s22, 2
      %p103 = por %p101, %p102
      %p104 = scmp.ne.s32.totalorder %s95, %s96
      %p105 = scmp.eq.s32.totalorder %s22, 0
      %p106 = por %p104, %p105
      %p107 = scmp.ne.s32.totalorder %s95, %s96
      %p108 = scmp.eq.s32.totalorder %s23, 2
      %p109 = por %p107, %p108
      %p111 = scmp.ne.s32.totalorder %s96, %s110
      %p112 = scmp.eq.s32.totalorder %s23, 0
      %p113 = por %p111, %p112
      %s114 = ssub.s32 %s17, %s24
      %p115 = scmp.eq.s32.totalorder %s114, 0
      %s117 = sadd.s32 %s116, 1
      %s118 = scalar_select %p115, %s116, %s117
      %p121 = pneg %p115
      %p122 = scmp.eq.s32.totalorder %s17, 2
      %p123 = por %p121, %p122
      %p124 = scmp.ne.s32.totalorder %s116, %s119
      %p125 = scmp.eq.s32.totalorder %s17, 0
      %p126 = por %p124, %p125
      %p127 = scmp.ne.s32.totalorder %s116, %s119
      %p128 = scmp.eq.s32.totalorder %s22, 2
      %p129 = por %p127, %p128
      %p130 = scmp.ne.s32.totalorder %s119, %s120
      %p131 = scmp.eq.s32.totalorder %s22, 0
      %p132 = por %p130, %p131
      %p133 = scmp.ne.s32.totalorder %s119, %s120
      %p134 = scmp.eq.s32.totalorder %s23, 2
      %p135 = por %p133, %p134
      %p137 = scmp.ne.s32.totalorder %s120, %s136
      %p138 = scmp.eq.s32.totalorder %s23, 0
      %p139 = por %p137, %p138
      %p140 = scmp.le.s32.totalorder 1, %s17
      %p141 = scmp.lt.s32.totalorder %s17, 4
      %p142 = pnand %p140, %p141
      %p143 = pneg %p142
      // Predicated region
      $region9: #{tpu_custom_call.1} parent=5 // pred_check
        _
      $region10: #{tpu_custom_call.1} parent=5 // pred_check_branch
        %145 = sbr.rel (%p142) target = $region12
      $region11: #{tpu_custom_call.1} parent=5 // pred_region
        %s146 = ssub.s32 %s17, 1
        // Predicated region
        $region13: #{tpu_custom_call.1} parent=11 // pred_check
          %p147 = pneg %p38
        $region14: #{tpu_custom_call.1} parent=11 // pred_check_branch
          %149 = sbr.rel (%p147) target = $region16
        $region15: #{tpu_custom_call.1} parent=11 // pred_region
          %s151 = ssub.s32 32, 32
          %152 = vsyncadd [#allocation3], %s151
          %s154 = sshll.u32 [#allocation2], 4
          %s155 = int_to_ptr.vmem [resolvable:$true] %s154
          %157 = dma.hbm_to_vmem [thread:$0]  %s0, 32, %s155, [#allocation3]
        $region16: #{tpu_custom_call.1} parent=11 // pred_fallthru
          _
        // Predicated region
        $region17: #{tpu_custom_call.1} parent=11 // pred_check
          %p158 = pneg %p85
        $region18: #{tpu_custom_call.1} parent=11 // pred_check_branch
          %160 = sbr.rel (%p158) target = $region20
        $region19: #{tpu_custom_call.1} parent=11 // pred_region
          _
        $region20: #{tpu_custom_call.1} parent=11 // pred_fallthru
          _
        // Predicated region
        $region21: #{tpu_custom_call.1} parent=11 // pred_check
          %p161 = pneg %p106
        $region22: #{tpu_custom_call.1} parent=11 // pred_check_branch
          %163 = sbr.rel (%p161) target = $region24
        $region23: #{tpu_custom_call.1} parent=11 // pred_region
          %s165 = ssub.s32 96, 96
          %166 = vsyncadd [#allocation6], %s165
          %s168 = sshll.u32 [#allocation7], 4
          %s169 = int_to_ptr.vmem [resolvable:$true] %s168
          %171 = dma.hbm_to_vmem [thread:$0]  %s3, 96, %s169, [#allocation6]
        $region24: #{tpu_custom_call.1} parent=11 // pred_fallthru
          _
      $region12: #{tpu_custom_call.1} parent=5 // pred_fallthru
        _
      %p172 = scmp.lt.s32.totalorder %s17, 3
      // Predicated region
      $region25: #{tpu_custom_call.1} parent=5 // pred_check
        %p173 = pneg %p172
      $region26: #{tpu_custom_call.1} parent=5 // pred_check_branch
        %175 = sbr.rel (%p173) target = $region28
      $region27: #{tpu_custom_call.1} parent=5 // pred_region
        // Predicated region
        $region29: #{tpu_custom_call.1} parent=27 // pred_check
          %p176 = pneg %p58
        $region30: #{tpu_custom_call.1} parent=27 // pred_check_branch
          %178 = sbr.rel (%p176) target = $region32
        $region31: #{tpu_custom_call.1} parent=27 // pred_region
          %s179 = sand.u32 %s17, 1
          %s180 = scalar_lea.sflag [#allocation6], %s179
          %s181 = sand.u32 %s48, 1
          %s182 = smul.addr %s181, 64
          %s183 = scalar_lea.vmem [#allocation5], %s182
          %s184 = smul.u32 2, %s17
          %s186 = ssub.s32 1024, 1024
          %187 = vsyncadd %s180, %s186
          %s188 = smul.addr %s184, 128
          %s189 = scalar_lea.hbm %s1, %s188
          %s190 = sshll.u32 %s183, 4
          %s191 = int_to_ptr.vmem [resolvable:$true] %s190
          %196 = dma.hbm_to_vmem [thread:$0]  %s189, 1024, %s191, %s180, 768, 256, 16
        $region32: #{tpu_custom_call.1} parent=27 // pred_fallthru
          _
      $region28: #{tpu_custom_call.1} parent=5 // pred_fallthru
        _
      %p197 = scmp.le.s32.totalorder 1, %s17
      %p198 = scmp.lt.s32.totalorder %s17, 4
      %p199 = pnand %p197, %p198
      %p200 = pneg %p199
      // Predicated region
      $region33: #{tpu_custom_call.1} parent=5 // pred_check
        _
      $region34: #{tpu_custom_call.1} parent=5 // pred_check_branch
        %202 = sbr.rel (%p199) target = $region36
      $region35: #{tpu_custom_call.1} parent=5 // pred_region
        %s203 = ssub.s32 %s17, 1
        // Predicated region
        $region37: #{tpu_custom_call.1} parent=35 // pred_check
          %p204 = pneg %p38
        $region38: #{tpu_custom_call.1} parent=35 // pred_check_branch
          %206 = sbr.rel (%p204) target = $region40
        $region39: #{tpu_custom_call.1} parent=35 // pred_region
          %207 = dma.done [#allocation3], 32
        $region40: #{tpu_custom_call.1} parent=35 // pred_fallthru
          _
        %s208 = sand.u32 %s22, 1
        %s209 = scalar_lea.sflag [#allocation6], %s208
        %s210 = sand.u32 %s51, 1
        %s211 = smul.addr %s210, 64
        %s212 = scalar_lea.vmem [#allocation5], %s211
        // Predicated region
        $region41: #{tpu_custom_call.1} parent=35 // pred_check
          %p213 = pneg %p64
        $region42: #{tpu_custom_call.1} parent=35 // pred_check_branch
          %215 = sbr.rel (%p213) target = $region44
        $region43: #{tpu_custom_call.1} parent=35 // pred_region
          %216 = dma.done %s209, 1024
        $region44: #{tpu_custom_call.1} parent=35 // pred_fallthru
          _
        // Predicated region
        $region45: #{tpu_custom_call.1} parent=35 // pred_check
          %p217 = pneg %p106
        $region46: #{tpu_custom_call.1} parent=35 // pred_check_branch
          %219 = sbr.rel (%p217) target = $region48
        $region47: #{tpu_custom_call.1} parent=35 // pred_region
          %220 = dma.done [#allocation6], 96
        $region48: #{tpu_custom_call.1} parent=35 // pred_fallthru
          _
        %p221 = pneg %p38
        %p222 = pneg %p35
        %s223 = sand.u32 %s22, 1
        %s224 = scalar_lea.sflag [#allocation6], %s223
        %s225 = sand.u32 %s51, 1
        %s226 = smul.addr %s225, 64
        %s227 = scalar_lea.vmem [#allocation5], %s226
        %p228 = pneg %p64
        %p229 = pneg %p61
        %p230 = pneg %p85
        %p231 = pneg %p82
        %p232 = pneg %p106
        %p233 = pneg %p103
        %p234 = pneg %p132
        %p235 = pneg %p129
        %s236 = sand.u32 %s119, 1
        %s237 = scalar_lea.sflag [#allocation4], %s236
        %s238 = sand.u32 %s119, 1
        %s239 = smul.addr %s238, 4
        %s240 = scalar_lea.vmem [#allocation8], %s239
        %s241 = smul.u32 2, %s22
        %s242 = smul.u32 2, %s22
        %s244 = smul.u32 %s22, 256
        %v245 = vld [vmem:[#allocation2] sm:$0x3]
        %v246 = vxor.u32 %v245, 2147483648
        %v247 = vmul.f32 %v246, 1.442695
        %v248 = vpow.pop %v247
        %v249 = vadd.f32 %v248, 1.0
        %v250 = vrcp.pop %v249
        %v251 = vmul.f32 1.0, %v250
        %v252 = vmul.f32 %v245, %v251
        %v253 = vpack.c.bf16 %v252, %v252
        %v254 = vld [vmem:[%s212] sm:$0xff]
        %v255 = vld [vmem:[%s212 + $0x8] sm:$0xff]
        %v256 = vld [vmem:[%s212 + $0x10] sm:$0xff]
        %v257 = vld [vmem:[%s212 + $0x18] sm:$0xff]
        %v258 = vld [vmem:[%s212 + $0x20] sm:$0xff]
        %v259 = vld [vmem:[%s212 + $0x28] sm:$0xff]
        %v260 = vld [vmem:[%s212 + $0x30] sm:$0xff]
        %v261 = vld [vmem:[%s212 + $0x38] sm:$0xff]
        %v262 = vunpack.c.l.s8.bf16 %v254
        %v263 = vunpack.c.l.s8.bf16 %v255
        %v264 = vunpack.c.h.s8.bf16 %v254
        %v265 = vunpack.c.h.s8.bf16 %v255
        %v266 = vunpack.c.l.s8.bf16 %v256
        %v267 = vunpack.c.l.s8.bf16 %v257
        %v268 = vunpack.c.h.s8.bf16 %v256
        %v269 = vunpack.c.h.s8.bf16 %v257
        %v270 = vunpack.c.l.s8.bf16 %v258
        %v271 = vunpack.c.l.s8.bf16 %v259
        %v272 = vunpack.c.h.s8.bf16 %v258
        %v273 = vunpack.c.h.s8.bf16 %v259
        %v274 = vunpack.c.l.s8.bf16 %v260
        %v275 = vunpack.c.l.s8.bf16 %v261
        %v276 = vunpack.c.h.s8.bf16 %v260
        %v277 = vunpack.c.h.s8.bf16 %v261
        %278 = vmatprep.subr.bf16.mxu0 %v263
        %279 = vmatpush1.bf16.msra.mxu0 %v262
        %280 = vmatprep.subr.bf16.mxu0 %v265
        %281 = vmatpush1.bf16.msra.mxu0 %v264
        %282 = vmatprep.subr.bf16.mxu0 %v267
        %283 = vmatpush1.bf16.msra.mxu0 %v266
        %284 = vmatprep.subr.bf16.mxu0 %v269
        %285 = vmatpush1.bf16.msra.mxu0 %v268
        %286 = vmatprep.subr.bf16.mxu0 %v271
        %287 = vmatpush1.bf16.msra.mxu0 %v270
        %288 = vmatprep.subr.bf16.mxu0 %v273
        %289 = vmatpush1.bf16.msra.mxu0 %v272
        %290 = vmatprep.subr.bf16.mxu0 %v275
        %291 = vmatpush1.bf16.msra.mxu0 %v274
        %292 = vmatprep.subr.bf16.mxu0 %v277
        %293 = vmatpush1.bf16.msra.mxu0 %v276
        %294 = vmatprep.subr.bf16.mxu0 0
        %295 = vmatpush1.bf16.msra.mxu0 0
        %296 = vmatprep.subr.bf16.mxu0 0
        %297 = vmatpush1.bf16.msra.mxu0 0
        %298 = vmatprep.subr.bf16.mxu0 0
        %299 = vmatpush1.bf16.msra.mxu0 0
        %300 = vmatprep.subr.bf16.mxu0 0
        %301 = vmatpush1.bf16.msra.mxu0 0
        %302 = vmatprep.subr.bf16.mxu0 0
        %303 = vmatpush1.bf16.msra.mxu0 0
        %304 = vmatprep.subr.bf16.mxu0 0
        %305 = vmatpush1.bf16.msra.mxu0 0
        %306 = vmatprep.subr.bf16.mxu0 0
        %307 = vmatpush1.bf16.msra.mxu0 0
        %308 = vmatprep.subr.bf16.mxu0 0
        %309 = vmatpush1.bf16.msra.mxu0 0
        %310 = vmatprep.mubr.bf16.mxu0 0
        %311 = vmatmul.mubr.bf16.gmra.mrb[0].mxu0 %v253
        %v312 = vpop.f32.mrb[0].mxu0
        %v313 = vadd.f32 0.0, %v312
        %v314 = vpop.f32.mrb[0].mxu0
        %v315 = vadd.f32 0.0, %v314
        %v316 = vpop.f32.mrb[0].mxu0
        %v317 = vpop.f32.mrb[0].mxu0
        %318 = vdwg.mxu0
        %s319 = sshra.s32 %s244, 7
        %s320 = sand.u32 %s244, 127
        %s321 = scalar_lea.vmem %s2, %s319
        %v322 = vld [vmem:[%s321] sm:$0x3]
        %s323 = scalar_lea.vmem [#allocation7], %s319
        %v324 = vld [vmem:[%s323] sm:$0x3]
        %v326 = vlaneseq
        %v327 = vshrl.u32 %v326, 7
        %v328 = vsub.s32 0, %v327
        %v329 = vrot.slane %v322, %v328
        %v330 = vlaneseq
        %v331 = vshrl.u32 %v330, 7
        %v332 = vsub.s32 1, %v331
        %v333 = vrot.slane %v322, %v332
        %v336 = vmul.f32 %v313, %v329
        %v337 = vmul.f32 %v315, %v333
        %v339 = vlaneseq
        %v340 = vshrl.u32 %v339, 7
        %v341 = vsub.s32 0, %v340
        %v342 = vrot.slane %v324, %v341
        %v343 = vlaneseq
        %v344 = vshrl.u32 %v343, 7
        %v345 = vsub.s32 1, %v344
        %v346 = vrot.slane %v324, %v345
        %v349 = vadd.f32 %v336, %v342
        %v350 = vadd.f32 %v337, %v346
        %v353 = vcombine.low %v349, %v350
        %v355 = vunpack.c.l.s4 1983009808
        %v356 = vunpack.c.0.s8 %v355
        %v357 = vlaneseq
        %v358 = vshrl.u32 %v357, 7
        %v359 = vsub.s32 %v356, %v358
        %v360 = vrot.slane %v353, %v359
        %362 = vst [vmem:[%s240] sm:$0xf] %v360
        %s363 = sand.u32 %s119, 1
        %s364 = scalar_lea.sflag [#allocation4], %s363
        %s365 = sand.u32 %s119, 1
        %s366 = smul.addr %s365, 4
        %s367 = scalar_lea.vmem [#allocation8], %s366
        // Predicated region
        $region49: #{tpu_custom_call.1} parent=35 // pred_check
          %p368 = pneg %p129
        $region50: #{tpu_custom_call.1} parent=35 // pred_check_branch
          %370 = sbr.rel (%p368) target = $region52
        $region51: #{tpu_custom_call.1} parent=35 // pred_region
          %s371 = smul.u32 2, %s22
          %s373 = ssub.s32 64, 64
          %374 = vsyncadd %s364, %s373
          %s375 = smul.addr %s371, 32
          %s376 = scalar_lea.hbm %s4, %s375
          %s378 = sshll.u32 %s367, 4
          %s379 = int_to_ptr.vmem [resolvable:$true] %s378
          %381 = dma.vmem_to_hbm [thread:$0]  %s379, 64, %s376, %s364
        $region52: #{tpu_custom_call.1} parent=35 // pred_fallthru
          _
      $region36: #{tpu_custom_call.1} parent=5 // pred_fallthru
        _
      %p382 = scmp.le.s32.totalorder 2, %s17
      // Predicated region
      $region53: #{tpu_custom_call.1} parent=5 // pred_check
        %p383 = pneg %p382
      $region54: #{tpu_custom_call.1} parent=5 // pred_check_branch
        %385 = sbr.rel (%p383) target = $region56
      $region55: #{tpu_custom_call.1} parent=5 // pred_region
        %s386 = ssub.s32 %s17, 2
        // Predicated region
        $region57: #{tpu_custom_call.1} parent=55 // pred_check
          %p387 = pneg %p135
        $region58: #{tpu_custom_call.1} parent=55 // pred_check_branch
          %389 = sbr.rel (%p387) target = $region60
        $region59: #{tpu_custom_call.1} parent=55 // pred_region
          %s390 = sand.u32 %s120, 1
          %s391 = scalar_lea.sflag [#allocation4], %s390
          %s392 = sand.u32 %s120, 1
          %s393 = smul.addr %s392, 4
          %s394 = scalar_lea.vmem [#allocation8], %s393
          %395 = dma.done %s391, 64
        $region60: #{tpu_custom_call.1} parent=55 // pred_fallthru
          _
      $region56: #{tpu_custom_call.1} parent=5 // pred_fallthru
        _
    $region6: #{tpu_custom_call.1} parent=1 // loop_footer
      %s21 = sadd.s32 1, %s17
    $region7: #{tpu_custom_call.1} parent=1 // loop_footer_branch
      %16 = sbr.rel target = $region3
    $region8: #{tpu_custom_call.1} parent=1 // loop_exit
      _
    %396 = vsyncpa [#allocation3], 1
    %s397 = scalar_lea.sflag [#allocation3], 1
    %398 = vsyncpa %s397, 1
    %399 = vsyncpa [#allocation6], 1
    %s400 = scalar_lea.sflag [#allocation6], 1
    %401 = vsyncpa %s400, 1
    %402 = vsyncpa [#allocation4], 1
    %s403 = scalar_lea.sflag [#allocation4], 1
    %404 = vsyncpa %s403, 1

</llo_original>
